<compile_context>
chip_gen: v7x
topology: tpu7x:2x2x1
jax: 0.10.0
libtpu: 0.0.40
codegen_flags: <defaults>
</compile_context>

<pallas_src>
import functools

import jax
import jax.numpy as jnp
from jax.experimental import pallas as pl
from jax.experimental.pallas import tpu as pltpu


KERNEL_SIZE_OPS = {"1x1": 1, "3x3": 3, "5x5": 5, "7x7": 7}
PADDING_OPS = {"1x1": 0, "3x3": 1, "5x5": 2, "7x7": 3}
# TODO(synk): the original module raises on '4x4' (no PADDING_OPS entry), so
#             even kernel sizes are intentionally unsupported here as well.


def _sepconv_kernel(x_ref, dww_ref, pw_ref, o_ref, *, k, act, neg_slope):
    """One (batch, row-tile) grid step.

    x_ref:   (1, 1, TH+k-1, Cin, W+k-1)  halo row tile, layout (rows, chan, width)
    dww_ref: (k*k, Cin, 1)               depthwise weights, tap-major, f32
    pw_ref:  (Cout, Cin)                 pointwise 1x1 weights (bf16 or f32)
    o_ref:   (1, TH, Cout, W)            output rows, (Cout, W) layout-matched
    """
    x = x_ref[0, 0]                                   # (THp, Cin, Wp), f32
    thp, cin, wp = x.shape
    th = thp - (k - 1)
    w = wp - (k - 1)

    # ---- depthwise k x k conv: k^2 lane-shifted, per-channel-scaled adds ----
    acc = jnp.zeros((th, cin, w), jnp.float32)
    for dh in range(k):
        for dw in range(k):
            tap = dww_ref[dh * k + dw]                # (Cin, 1) per-channel scale
            acc = acc + x[dh:dh + th, :, dw:dw + w] * tap

    # ---- pointwise 1x1 conv + activation: one MXU matmul per output row ----
    pw = pw_ref[...]                                  # (Cout, Cin)
    for r in range(th):
        y = jnp.dot(pw, acc[r].astype(pw.dtype),
                    preferred_element_type=jnp.float32)   # (Cout, W), f32 acc
        if act == "ReLU":
            y = jnp.maximum(y, 0.0)
        elif act == "LeakyReLU":
            y = jnp.where(y >= 0.0, y, y * neg_slope)
        o_ref[0, r] = y.astype(o_ref.dtype)


def _pick_row_tile(H, W, pad, cin, cout, row_tile=None):
    """Largest divisor of H whose double-buffered in+out tiles fit a modest,
    v7x-safe VMEM budget (64 MiB chip / 32 MiB scoped default)."""
    if row_tile is not None:
        if H % row_tile:
            raise ValueError("row_tile must divide H")
        return row_tile
    budget = 8 << 20
    for th in range(H, 0, -1):
        if H % th:
            continue
        tile_bytes = 2 * 4 * ((th + 2 * pad) * cin * (W + 2 * pad) + th * cout * W)
        if tile_bytes <= budget:
            return th
    return H


def sep_conv(x, dw_weight, pw_weight, kernel_size="3x3", act_op="ReLU",
             row_tile=None, mxu_bf16=True):
    """SepConvOp forward pass.

    x:         (N, Cin, H, W)    float32 NCHW (PyTorch layout)
    dw_weight: (Cin, 1, k, k)    depthwise Conv2d weight (groups=Cin, no bias)
    pw_weight: (Cout, Cin, 1, 1) pointwise 1x1 Conv2d weight (no bias)
    returns:   (N, Cout, H, W)   float32 NCHW
    """
    if act_op not in ("none", "ReLU", "LeakyReLU"):
        raise ValueError(f"unsupported act_op: {act_op}")
    k = KERNEL_SIZE_OPS[kernel_size]
    p = PADDING_OPS[kernel_size]
    N, Cin, H, W = x.shape
    Cout = pw_weight.shape[0]

    th = _pick_row_tile(H, W, p, Cin, Cout, row_tile)
    n_t = H // th
    thp, wp = th + 2 * p, W + 2 * p

    # --- wrapper glue (one fused layout pass): NCHW -> (N, H, Cin, W),
    #     zero pad, gather overlapping (k-1)-row halo tiles.
    # TODO(synk): for very large H, replace the halo gather with pl.Element
    #             element-offset windows or manual double-buffered DMA so the
    #             2*pad halo rows are not duplicated in HBM.
    x_nhcw = jnp.transpose(x.astype(jnp.float32), (0, 2, 1, 3))     # (N, H, Cin, W)
    x_pad = jnp.pad(x_nhcw, ((0, 0), (p, p), (0, 0), (p, p)))       # (N, Hp, Cin, Wp)
    if n_t == 1:
        x_tiles = x_pad[:, None]                                    # (N, 1, Hp, Cin, Wp)
    else:
        row_idx = jnp.arange(n_t)[:, None] * th + jnp.arange(thp)[None, :]
        x_tiles = jnp.take(x_pad, row_idx, axis=1)                  # (N, nt, THp, Cin, Wp)

    # Matmul-/broadcast-ready weight layouts; constant index_maps below keep
    # them VMEM-resident across the whole grid.
    dww = jnp.transpose(dw_weight.reshape(Cin, k * k), (1, 0)) \
             .reshape(k * k, Cin, 1).astype(jnp.float32)            # (k*k, Cin, 1)
    pw = pw_weight.reshape(Cout, Cin).astype(
        jnp.bfloat16 if mxu_bf16 else jnp.float32)                  # (Cout, Cin)

    kernel = functools.partial(_sepconv_kernel, k=k, act=act_op, neg_slope=0.2)

    out_nhcw = pl.pallas_call(
        kernel,
        out_shape=jax.ShapeDtypeStruct((N, H, Cout, W), jnp.float32),
        grid_spec=pltpu.PrefetchScalarGridSpec(
            num_scalar_prefetch=0,
            grid=(N, n_t),
            in_specs=[
                pl.BlockSpec((1, 1, thp, Cin, wp), lambda n, i: (n, i, 0, 0, 0)),
                pl.BlockSpec((k * k, Cin, 1), lambda n, i: (0, 0, 0)),
                pl.BlockSpec((Cout, Cin), lambda n, i: (0, 0)),
            ],
            out_specs=pl.BlockSpec((1, th, Cout, W), lambda n, i: (n, i, 0, 0)),
        ),
        compiler_params=pltpu.CompilerParams(
            dimension_semantics=("parallel", "parallel")),
    )(x_tiles, dww, pw)

    return jnp.transpose(out_nhcw, (0, 2, 1, 3))                    # back to NCHW


def _reference(x, dw_weight, pw_weight, kernel_size, act_op):
    """Plain-JAX reference matching the PyTorch module (eval semantics)."""
    k = KERNEL_SIZE_OPS[kernel_size]
    p = PADDING_OPS[kernel_size]
    y = jax.lax.conv_general_dilated(
        x, dw_weight, window_strides=(1, 1), padding=((p, p), (p, p)),
        dimension_numbers=("NCHW", "OIHW", "NCHW"),
        feature_group_count=x.shape[1],
        precision=jax.lax.Precision.HIGHEST)
    y = jax.lax.conv_general_dilated(
        y, pw_weight, window_strides=(1, 1), padding=((0, 0), (0, 0)),
        dimension_numbers=("NCHW", "OIHW", "NCHW"),
        precision=jax.lax.Precision.HIGHEST)
    if act_op == "ReLU":
        y = jnp.maximum(y, 0.0)
    elif act_op == "LeakyReLU":
        y = jnp.where(y >= 0.0, y, 0.2 * y)
    return y


if __name__ == "__main__":
    key = jax.random.PRNGKey(0)
    N, Cin, Cout, H, W = 2, 4, 8, 16, 16
    k_x, k_dw, k_pw = jax.random.split(key, 3)
    x = jax.random.normal(k_x, (N, Cin, H, W), dtype=jnp.float32)

    # (kernel_size, act_op, row_tile, bf16 MXU inputs)
    configs = [
        ("3x3", "ReLU", 8, True),          # 2 row tiles, bf16 MXU path
        ("5x5", "LeakyReLU", None, True),  # auto tile, LeakyReLU branch
        ("3x3", "none", None, False),      # f32 MXU path, no activation
    ]
    for ks, act, rt, use_bf16 in configs:
        k = KERNEL_SIZE_OPS[ks]
        # unit-variance init keeps bf16 MXU-input quantisation (~2^-9 relative)
        # well inside the test tolerance below
        dw_w = jax.random.normal(k_dw, (Cin, 1, k, k), dtype=jnp.float32) / k
        pw_w = jax.random.normal(k_pw, (Cout, Cin, 1, 1),
                                 dtype=jnp.float32) / (Cin ** 0.5)

        out = jax.block_until_ready(
            sep_conv(x, dw_w, pw_w, kernel_size=ks, act_op=act,
                     row_tile=rt, mxu_bf16=use_bf16))
        ref = _reference(x, dw_w, pw_w, ks, act)
        assert out.shape == (N, Cout, H, W), out.shape
        # tolerance covers bf16 rounding of the MXU matmul inputs
        assert jnp.allclose(out, ref, atol=5e-2, rtol=5e-2), (
            ks, act, float(jnp.max(jnp.abs(out - ref))))

    print("KERNEL_OK")
</pallas_src>

<mosaic_0001>
module attributes {stable_mosaic.version = 11 : i64} {
  func.func @_sepconv_kernel(%arg0: i32, %arg1: i32, %arg2: memref<1x1x10x4x18xf32, #tpu.memory_space<vmem>>, %arg3: memref<9x4x1xf32, #tpu.memory_space<vmem>>, %arg4: memref<8x4xbf16, #tpu.memory_space<vmem>>, %arg5: memref<1x8x8x16xf32, #tpu.memory_space<vmem>>) attributes {dimension_semantics = [#tpu.dimension_semantics<parallel>, #tpu.dimension_semantics<parallel>], iteration_bounds = array<i64: 2, 2>, scalar_prefetch = 0 : i64, scratch_operands = 0 : i64, tpu.core_type = #tpu.core_type<tc>, window_params = [{transform_indices = @transform_0, window_bounds = array<i64: 1, 1, 10, 4, 18>}, {pipeline_mode = #tpu.pipeline_mode<synchronous>, transform_indices = @transform_1, window_bounds = array<i64: 9, 4, 1>}, {pipeline_mode = #tpu.pipeline_mode<synchronous>, transform_indices = @transform_2, window_bounds = array<i64: 8, 4>}, {transform_indices = @transform_3, window_bounds = array<i64: 1, 8, 8, 16>}]} {
    %c0 = arith.constant 0 : index
    %c0_0 = arith.constant 0 : index
    %c0_1 = arith.constant 0 : index
    %c0_2 = arith.constant 0 : index
    %c0_3 = arith.constant 0 : index
    %0 = vector.load %arg2[%c0, %c0_0, %c0_1, %c0_2, %c0_3] : memref<1x1x10x4x18xf32, #tpu.memory_space<vmem>>, vector<1x1x10x4x18xf32>
    %1 = vector.shape_cast %0 : vector<1x1x10x4x18xf32> to vector<10x4x18xf32>
    %cst = arith.constant 0.000000e+00 : f32
    %2 = vector.broadcast %cst : f32 to vector<8x4x16xf32>
    %c0_4 = arith.constant 0 : index
    %c0_5 = arith.constant 0 : index
    %c0_6 = arith.constant 0 : index
    %3 = vector.load %arg3[%c0_4, %c0_5, %c0_6] : memref<9x4x1xf32, #tpu.memory_space<vmem>>, vector<1x4x1xf32>
    %4 = vector.shape_cast %3 : vector<1x4x1xf32> to vector<4x1xf32>
    %5 = vector.extract_strided_slice %1 {offsets = [0, 0, 0], sizes = [8, 4, 16], strides = [1, 1, 1]} : vector<10x4x18xf32> to vector<8x4x16xf32>
    %6 = vector.shape_cast %4 : vector<4x1xf32> to vector<1x4x1xf32>
    %7 = vector.broadcast %6 : vector<1x4x1xf32> to vector<8x4x16xf32>
    %8 = arith.mulf %5, %7 : vector<8x4x16xf32>
    %9 = arith.addf %2, %8 : vector<8x4x16xf32>
    %c1 = arith.constant 1 : index
    %c0_7 = arith.constant 0 : index
    %c0_8 = arith.constant 0 : index
    %10 = vector.load %arg3[%c1, %c0_7, %c0_8] : memref<9x4x1xf32, #tpu.memory_space<vmem>>, vector<1x4x1xf32>
    %11 = vector.shape_cast %10 : vector<1x4x1xf32> to vector<4x1xf32>
    %12 = vector.extract_strided_slice %1 {offsets = [0, 0, 1], sizes = [8, 4, 16], strides = [1, 1, 1]} : vector<10x4x18xf32> to vector<8x4x16xf32>
    %13 = vector.shape_cast %11 : vector<4x1xf32> to vector<1x4x1xf32>
    %14 = vector.broadcast %13 : vector<1x4x1xf32> to vector<8x4x16xf32>
    %15 = arith.mulf %12, %14 : vector<8x4x16xf32>
    %16 = arith.addf %9, %15 : vector<8x4x16xf32>
    %c2 = arith.constant 2 : index
    %c0_9 = arith.constant 0 : index
    %c0_10 = arith.constant 0 : index
    %17 = vector.load %arg3[%c2, %c0_9, %c0_10] : memref<9x4x1xf32, #tpu.memory_space<vmem>>, vector<1x4x1xf32>
    %18 = vector.shape_cast %17 : vector<1x4x1xf32> to vector<4x1xf32>
    %19 = vector.extract_strided_slice %1 {offsets = [0, 0, 2], sizes = [8, 4, 16], strides = [1, 1, 1]} : vector<10x4x18xf32> to vector<8x4x16xf32>
    %20 = vector.shape_cast %18 : vector<4x1xf32> to vector<1x4x1xf32>
    %21 = vector.broadcast %20 : vector<1x4x1xf32> to vector<8x4x16xf32>
    %22 = arith.mulf %19, %21 : vector<8x4x16xf32>
    %23 = arith.addf %16, %22 : vector<8x4x16xf32>
    %c3 = arith.constant 3 : index
    %c0_11 = arith.constant 0 : index
    %c0_12 = arith.constant 0 : index
    %24 = vector.load %arg3[%c3, %c0_11, %c0_12] : memref<9x4x1xf32, #tpu.memory_space<vmem>>, vector<1x4x1xf32>
    %25 = vector.shape_cast %24 : vector<1x4x1xf32> to vector<4x1xf32>
    %26 = vector.extract_strided_slice %1 {offsets = [1, 0, 0], sizes = [8, 4, 16], strides = [1, 1, 1]} : vector<10x4x18xf32> to vector<8x4x16xf32>
    %27 = vector.shape_cast %25 : vector<4x1xf32> to vector<1x4x1xf32>
    %28 = vector.broadcast %27 : vector<1x4x1xf32> to vector<8x4x16xf32>
    %29 = arith.mulf %26, %28 : vector<8x4x16xf32>
    %30 = arith.addf %23, %29 : vector<8x4x16xf32>
    %c4 = arith.constant 4 : index
    %c0_13 = arith.constant 0 : index
    %c0_14 = arith.constant 0 : index
    %31 = vector.load %arg3[%c4, %c0_13, %c0_14] : memref<9x4x1xf32, #tpu.memory_space<vmem>>, vector<1x4x1xf32>
    %32 = vector.shape_cast %31 : vector<1x4x1xf32> to vector<4x1xf32>
    %33 = vector.extract_strided_slice %1 {offsets = [1, 0, 1], sizes = [8, 4, 16], strides = [1, 1, 1]} : vector<10x4x18xf32> to vector<8x4x16xf32>
    %34 = vector.shape_cast %32 : vector<4x1xf32> to vector<1x4x1xf32>
    %35 = vector.broadcast %34 : vector<1x4x1xf32> to vector<8x4x16xf32>
    %36 = arith.mulf %33, %35 : vector<8x4x16xf32>
    %37 = arith.addf %30, %36 : vector<8x4x16xf32>
    %c5 = arith.constant 5 : index
    %c0_15 = arith.constant 0 : index
    %c0_16 = arith.constant 0 : index
    %38 = vector.load %arg3[%c5, %c0_15, %c0_16] : memref<9x4x1xf32, #tpu.memory_space<vmem>>, vector<1x4x1xf32>
    %39 = vector.shape_cast %38 : vector<1x4x1xf32> to vector<4x1xf32>
    %40 = vector.extract_strided_slice %1 {offsets = [1, 0, 2], sizes = [8, 4, 16], strides = [1, 1, 1]} : vector<10x4x18xf32> to vector<8x4x16xf32>
    %41 = vector.shape_cast %39 : vector<4x1xf32> to vector<1x4x1xf32>
    %42 = vector.broadcast %41 : vector<1x4x1xf32> to vector<8x4x16xf32>
    %43 = arith.mulf %40, %42 : vector<8x4x16xf32>
    %44 = arith.addf %37, %43 : vector<8x4x16xf32>
    %c6 = arith.constant 6 : index
    %c0_17 = arith.constant 0 : index
    %c0_18 = arith.constant 0 : index
    %45 = vector.load %arg3[%c6, %c0_17, %c0_18] : memref<9x4x1xf32, #tpu.memory_space<vmem>>, vector<1x4x1xf32>
    %46 = vector.shape_cast %45 : vector<1x4x1xf32> to vector<4x1xf32>
    %47 = vector.extract_strided_slice %1 {offsets = [2, 0, 0], sizes = [8, 4, 16], strides = [1, 1, 1]} : vector<10x4x18xf32> to vector<8x4x16xf32>
    %48 = vector.shape_cast %46 : vector<4x1xf32> to vector<1x4x1xf32>
    %49 = vector.broadcast %48 : vector<1x4x1xf32> to vector<8x4x16xf32>
    %50 = arith.mulf %47, %49 : vector<8x4x16xf32>
    %51 = arith.addf %44, %50 : vector<8x4x16xf32>
    %c7 = arith.constant 7 : index
    %c0_19 = arith.constant 0 : index
    %c0_20 = arith.constant 0 : index
    %52 = vector.load %arg3[%c7, %c0_19, %c0_20] : memref<9x4x1xf32, #tpu.memory_space<vmem>>, vector<1x4x1xf32>
    %53 = vector.shape_cast %52 : vector<1x4x1xf32> to vector<4x1xf32>
    %54 = vector.extract_strided_slice %1 {offsets = [2, 0, 1], sizes = [8, 4, 16], strides = [1, 1, 1]} : vector<10x4x18xf32> to vector<8x4x16xf32>
    %55 = vector.shape_cast %53 : vector<4x1xf32> to vector<1x4x1xf32>
    %56 = vector.broadcast %55 : vector<1x4x1xf32> to vector<8x4x16xf32>
    %57 = arith.mulf %54, %56 : vector<8x4x16xf32>
    %58 = arith.addf %51, %57 : vector<8x4x16xf32>
    %c8 = arith.constant 8 : index
    %c0_21 = arith.constant 0 : index
    %c0_22 = arith.constant 0 : index
    %59 = vector.load %arg3[%c8, %c0_21, %c0_22] : memref<9x4x1xf32, #tpu.memory_space<vmem>>, vector<1x4x1xf32>
    %60 = vector.shape_cast %59 : vector<1x4x1xf32> to vector<4x1xf32>
    %61 = vector.extract_strided_slice %1 {offsets = [2, 0, 2], sizes = [8, 4, 16], strides = [1, 1, 1]} : vector<10x4x18xf32> to vector<8x4x16xf32>
    %62 = vector.shape_cast %60 : vector<4x1xf32> to vector<1x4x1xf32>
    %63 = vector.broadcast %62 : vector<1x4x1xf32> to vector<8x4x16xf32>
    %64 = arith.mulf %61, %63 : vector<8x4x16xf32>
    %65 = arith.addf %58, %64 : vector<8x4x16xf32>
    %c0_23 = arith.constant 0 : index
    %c0_24 = arith.constant 0 : index
    %66 = vector.load %arg4[%c0_23, %c0_24] : memref<8x4xbf16, #tpu.memory_space<vmem>>, vector<8x4xbf16>
    %67 = vector.extract_strided_slice %65 {offsets = [0, 0, 0], sizes = [1, 4, 16], strides = [1, 1, 1]} : vector<8x4x16xf32> to vector<1x4x16xf32>
    %68 = vector.shape_cast %67 : vector<1x4x16xf32> to vector<4x16xf32>
    %69 = arith.truncf %68 : vector<4x16xf32> to vector<4x16xbf16>
    %cst_25 = arith.constant dense<0.000000e+00> : vector<8x16xf32>
    %70 = tpu.matmul %66, %69, %cst_25 {dimension_numbers = #tpu.dot_dimension_numbers<[1], [0], [0], [1], [0, 0, 1, 1], [], []>} : vector<8x4xbf16>, vector<4x16xbf16>, vector<8x16xf32> -> vector<8x16xf32>
    %cst_26 = arith.constant 0.000000e+00 : f32
    %71 = vector.broadcast %cst_26 : f32 to vector<8x16xf32>
    %72 = arith.maximumf %70, %71 : vector<8x16xf32>
    %c0_27 = arith.constant 0 : index
    %c0_28 = arith.constant 0 : index
    %c0_29 = arith.constant 0 : index
    %c0_30 = arith.constant 0 : index
    %73 = vector.load %arg5[%c0_27, %c0_28, %c0_29, %c0_30] : memref<1x8x8x16xf32, #tpu.memory_space<vmem>>, vector<1x1x8x16xf32>
    %74 = vector.shape_cast %73 : vector<1x1x8x16xf32> to vector<8x16xf32>
    %75 = vector.shape_cast %72 : vector<8x16xf32> to vector<1x1x8x16xf32>
    tpu.vector_store %arg5[%c0_27, %c0_28, %c0_29, %c0_30], %75 {strides = array<i32>} : memref<1x8x8x16xf32, #tpu.memory_space<vmem>>, vector<1x1x8x16xf32>,
    %76 = vector.extract_strided_slice %65 {offsets = [1, 0, 0], sizes = [1, 4, 16], strides = [1, 1, 1]} : vector<8x4x16xf32> to vector<1x4x16xf32>
    %77 = vector.shape_cast %76 : vector<1x4x16xf32> to vector<4x16xf32>
    %78 = arith.truncf %77 : vector<4x16xf32> to vector<4x16xbf16>
    %cst_31 = arith.constant dense<0.000000e+00> : vector<8x16xf32>
    %79 = tpu.matmul %66, %78, %cst_31 {dimension_numbers = #tpu.dot_dimension_numbers<[1], [0], [0], [1], [0, 0, 1, 1], [], []>} : vector<8x4xbf16>, vector<4x16xbf16>, vector<8x16xf32> -> vector<8x16xf32>
    %cst_32 = arith.constant 0.000000e+00 : f32
    %80 = vector.broadcast %cst_32 : f32 to vector<8x16xf32>
    %81 = arith.maximumf %79, %80 : vector<8x16xf32>
    %c0_33 = arith.constant 0 : index
    %c1_34 = arith.constant 1 : index
    %c0_35 = arith.constant 0 : index
    %c0_36 = arith.constant 0 : index
    %82 = vector.load %arg5[%c0_33, %c1_34, %c0_35, %c0_36] : memref<1x8x8x16xf32, #tpu.memory_space<vmem>>, vector<1x1x8x16xf32>
    %83 = vector.shape_cast %82 : vector<1x1x8x16xf32> to vector<8x16xf32>
    %84 = vector.shape_cast %81 : vector<8x16xf32> to vector<1x1x8x16xf32>
    tpu.vector_store %arg5[%c0_33, %c1_34, %c0_35, %c0_36], %84 {strides = array<i32>} : memref<1x8x8x16xf32, #tpu.memory_space<vmem>>, vector<1x1x8x16xf32>,
    %85 = vector.extract_strided_slice %65 {offsets = [2, 0, 0], sizes = [1, 4, 16], strides = [1, 1, 1]} : vector<8x4x16xf32> to vector<1x4x16xf32>
    %86 = vector.shape_cast %85 : vector<1x4x16xf32> to vector<4x16xf32>
    %87 = arith.truncf %86 : vector<4x16xf32> to vector<4x16xbf16>
    %cst_37 = arith.constant dense<0.000000e+00> : vector<8x16xf32>
    %88 = tpu.matmul %66, %87, %cst_37 {dimension_numbers = #tpu.dot_dimension_numbers<[1], [0], [0], [1], [0, 0, 1, 1], [], []>} : vector<8x4xbf16>, vector<4x16xbf16>, vector<8x16xf32> -> vector<8x16xf32>
    %cst_38 = arith.constant 0.000000e+00 : f32
    %89 = vector.broadcast %cst_38 : f32 to vector<8x16xf32>
    %90 = arith.maximumf %88, %89 : vector<8x16xf32>
    %c0_39 = arith.constant 0 : index
    %c2_40 = arith.constant 2 : index
    %c0_41 = arith.constant 0 : index
    %c0_42 = arith.constant 0 : index
    %91 = vector.load %arg5[%c0_39, %c2_40, %c0_41, %c0_42] : memref<1x8x8x16xf32, #tpu.memory_space<vmem>>, vector<1x1x8x16xf32>
    %92 = vector.shape_cast %91 : vector<1x1x8x16xf32> to vector<8x16xf32>
    %93 = vector.shape_cast %90 : vector<8x16xf32> to vector<1x1x8x16xf32>
    tpu.vector_store %arg5[%c0_39, %c2_40, %c0_41, %c0_42], %93 {strides = array<i32>} : memref<1x8x8x16xf32, #tpu.memory_space<vmem>>, vector<1x1x8x16xf32>,
    %94 = vector.extract_strided_slice %65 {offsets = [3, 0, 0], sizes = [1, 4, 16], strides = [1, 1, 1]} : vector<8x4x16xf32> to vector<1x4x16xf32>
    %95 = vector.shape_cast %94 : vector<1x4x16xf32> to vector<4x16xf32>
    %96 = arith.truncf %95 : vector<4x16xf32> to vector<4x16xbf16>
    %cst_43 = arith.constant dense<0.000000e+00> : vector<8x16xf32>
    %97 = tpu.matmul %66, %96, %cst_43 {dimension_numbers = #tpu.dot_dimension_numbers<[1], [0], [0], [1], [0, 0, 1, 1], [], []>} : vector<8x4xbf16>, vector<4x16xbf16>, vector<8x16xf32> -> vector<8x16xf32>
    %cst_44 = arith.constant 0.000000e+00 : f32
    %98 = vector.broadcast %cst_44 : f32 to vector<8x16xf32>
    %99 = arith.maximumf %97, %98 : vector<8x16xf32>
    %c0_45 = arith.constant 0 : index
    %c3_46 = arith.constant 3 : index
    %c0_47 = arith.constant 0 : index
    %c0_48 = arith.constant 0 : index
    %100 = vector.load %arg5[%c0_45, %c3_46, %c0_47, %c0_48] : memref<1x8x8x16xf32, #tpu.memory_space<vmem>>, vector<1x1x8x16xf32>
    %101 = vector.shape_cast %100 : vector<1x1x8x16xf32> to vector<8x16xf32>
    %102 = vector.shape_cast %99 : vector<8x16xf32> to vector<1x1x8x16xf32>
    tpu.vector_store %arg5[%c0_45, %c3_46, %c0_47, %c0_48], %102 {strides = array<i32>} : memref<1x8x8x16xf32, #tpu.memory_space<vmem>>, vector<1x1x8x16xf32>,
    %103 = vector.extract_strided_slice %65 {offsets = [4, 0, 0], sizes = [1, 4, 16], strides = [1, 1, 1]} : vector<8x4x16xf32> to vector<1x4x16xf32>
    %104 = vector.shape_cast %103 : vector<1x4x16xf32> to vector<4x16xf32>
    %105 = arith.truncf %104 : vector<4x16xf32> to vector<4x16xbf16>
    %cst_49 = arith.constant dense<0.000000e+00> : vector<8x16xf32>
    %106 = tpu.matmul %66, %105, %cst_49 {dimension_numbers = #tpu.dot_dimension_numbers<[1], [0], [0], [1], [0, 0, 1, 1], [], []>} : vector<8x4xbf16>, vector<4x16xbf16>, vector<8x16xf32> -> vector<8x16xf32>
    %cst_50 = arith.constant 0.000000e+00 : f32
    %107 = vector.broadcast %cst_50 : f32 to vector<8x16xf32>
    %108 = arith.maximumf %106, %107 : vector<8x16xf32>
    %c0_51 = arith.constant 0 : index
    %c4_52 = arith.constant 4 : index
    %c0_53 = arith.constant 0 : index
    %c0_54 = arith.constant 0 : index
    %109 = vector.load %arg5[%c0_51, %c4_52, %c0_53, %c0_54] : memref<1x8x8x16xf32, #tpu.memory_space<vmem>>, vector<1x1x8x16xf32>
    %110 = vector.shape_cast %109 : vector<1x1x8x16xf32> to vector<8x16xf32>
    %111 = vector.shape_cast %108 : vector<8x16xf32> to vector<1x1x8x16xf32>
    tpu.vector_store %arg5[%c0_51, %c4_52, %c0_53, %c0_54], %111 {strides = array<i32>} : memref<1x8x8x16xf32, #tpu.memory_space<vmem>>, vector<1x1x8x16xf32>,
    %112 = vector.extract_strided_slice %65 {offsets = [5, 0, 0], sizes = [1, 4, 16], strides = [1, 1, 1]} : vector<8x4x16xf32> to vector<1x4x16xf32>
    %113 = vector.shape_cast %112 : vector<1x4x16xf32> to vector<4x16xf32>
    %114 = arith.truncf %113 : vector<4x16xf32> to vector<4x16xbf16>
    %cst_55 = arith.constant dense<0.000000e+00> : vector<8x16xf32>
    %115 = tpu.matmul %66, %114, %cst_55 {dimension_numbers = #tpu.dot_dimension_numbers<[1], [0], [0], [1], [0, 0, 1, 1], [], []>} : vector<8x4xbf16>, vector<4x16xbf16>, vector<8x16xf32> -> vector<8x16xf32>
    %cst_56 = arith.constant 0.000000e+00 : f32
    %116 = vector.broadcast %cst_56 : f32 to vector<8x16xf32>
    %117 = arith.maximumf %115, %116 : vector<8x16xf32>
    %c0_57 = arith.constant 0 : index
    %c5_58 = arith.constant 5 : index
    %c0_59 = arith.constant 0 : index
    %c0_60 = arith.constant 0 : index
    %118 = vector.load %arg5[%c0_57, %c5_58, %c0_59, %c0_60] : memref<1x8x8x16xf32, #tpu.memory_space<vmem>>, vector<1x1x8x16xf32>
    %119 = vector.shape_cast %118 : vector<1x1x8x16xf32> to vector<8x16xf32>
    %120 = vector.shape_cast %117 : vector<8x16xf32> to vector<1x1x8x16xf32>
    tpu.vector_store %arg5[%c0_57, %c5_58, %c0_59, %c0_60], %120 {strides = array<i32>} : memref<1x8x8x16xf32, #tpu.memory_space<vmem>>, vector<1x1x8x16xf32>,
    %121 = vector.extract_strided_slice %65 {offsets = [6, 0, 0], sizes = [1, 4, 16], strides = [1, 1, 1]} : vector<8x4x16xf32> to vector<1x4x16xf32>
    %122 = vector.shape_cast %121 : vector<1x4x16xf32> to vector<4x16xf32>
    %123 = arith.truncf %122 : vector<4x16xf32> to vector<4x16xbf16>
    %cst_61 = arith.constant dense<0.000000e+00> : vector<8x16xf32>
    %124 = tpu.matmul %66, %123, %cst_61 {dimension_numbers = #tpu.dot_dimension_numbers<[1], [0], [0], [1], [0, 0, 1, 1], [], []>} : vector<8x4xbf16>, vector<4x16xbf16>, vector<8x16xf32> -> vector<8x16xf32>
    %cst_62 = arith.constant 0.000000e+00 : f32
    %125 = vector.broadcast %cst_62 : f32 to vector<8x16xf32>
    %126 = arith.maximumf %124, %125 : vector<8x16xf32>
    %c0_63 = arith.constant 0 : index
    %c6_64 = arith.constant 6 : index
    %c0_65 = arith.constant 0 : index
    %c0_66 = arith.constant 0 : index
    %127 = vector.load %arg5[%c0_63, %c6_64, %c0_65, %c0_66] : memref<1x8x8x16xf32, #tpu.memory_space<vmem>>, vector<1x1x8x16xf32>
    %128 = vector.shape_cast %127 : vector<1x1x8x16xf32> to vector<8x16xf32>
    %129 = vector.shape_cast %126 : vector<8x16xf32> to vector<1x1x8x16xf32>
    tpu.vector_store %arg5[%c0_63, %c6_64, %c0_65, %c0_66], %129 {strides = array<i32>} : memref<1x8x8x16xf32, #tpu.memory_space<vmem>>, vector<1x1x8x16xf32>,
    %130 = vector.extract_strided_slice %65 {offsets = [7, 0, 0], sizes = [1, 4, 16], strides = [1, 1, 1]} : vector<8x4x16xf32> to vector<1x4x16xf32>
    %131 = vector.shape_cast %130 : vector<1x4x16xf32> to vector<4x16xf32>
    %132 = arith.truncf %131 : vector<4x16xf32> to vector<4x16xbf16>
    %cst_67 = arith.constant dense<0.000000e+00> : vector<8x16xf32>
    %133 = tpu.matmul %66, %132, %cst_67 {dimension_numbers = #tpu.dot_dimension_numbers<[1], [0], [0], [1], [0, 0, 1, 1], [], []>} : vector<8x4xbf16>, vector<4x16xbf16>, vector<8x16xf32> -> vector<8x16xf32>
    %cst_68 = arith.constant 0.000000e+00 : f32
    %134 = vector.broadcast %cst_68 : f32 to vector<8x16xf32>
    %135 = arith.maximumf %133, %134 : vector<8x16xf32>
    %c0_69 = arith.constant 0 : index
    %c7_70 = arith.constant 7 : index
    %c0_71 = arith.constant 0 : index
    %c0_72 = arith.constant 0 : index
    %136 = vector.load %arg5[%c0_69, %c7_70, %c0_71, %c0_72] : memref<1x8x8x16xf32, #tpu.memory_space<vmem>>, vector<1x1x8x16xf32>
    %137 = vector.shape_cast %136 : vector<1x1x8x16xf32> to vector<8x16xf32>
    %138 = vector.shape_cast %135 : vector<8x16xf32> to vector<1x1x8x16xf32>
    tpu.vector_store %arg5[%c0_69, %c7_70, %c0_71, %c0_72], %138 {strides = array<i32>} : memref<1x8x8x16xf32, #tpu.memory_space<vmem>>, vector<1x1x8x16xf32>,
    return
  }
  func.func @transform_0(%arg0: i32, %arg1: i32) -> (i32, i32, i32, i32, i32) {
    %c0_i32 = arith.constant 0 : i32
    %c0_i32_0 = arith.constant 0 : i32
    %c0_i32_1 = arith.constant 0 : i32
    %c0_i32_2 = arith.constant 0 : i32
    return %arg0, %arg1, %c0_i32, %c0_i32_0, %c0_i32_1 : i32, i32, i32, i32, i32
  }
  func.func @transform_1(%arg0: i32, %arg1: i32) -> (i32, i32, i32) {
    %c0_i32 = arith.constant 0 : i32
    %c0_i32_0 = arith.constant 0 : i32
    %c0_i32_1 = arith.constant 0 : i32
    %c0_i32_2 = arith.constant 0 : i32
    return %c0_i32, %c0_i32_0, %c0_i32_1 : i32, i32, i32
  }
  func.func @transform_2(%arg0: i32, %arg1: i32) -> (i32, i32) {
    %c0_i32 = arith.constant 0 : i32
    %c0_i32_0 = arith.constant 0 : i32
    %c0_i32_1 = arith.constant 0 : i32
    return %c0_i32, %c0_i32_0 : i32, i32
  }
  func.func @transform_3(%arg0: i32, %arg1: i32) -> (i32, i32, i32, i32) {
    %c0_i32 = arith.constant 0 : i32
    %c0_i32_0 = arith.constant 0 : i32
    %c0_i32_1 = arith.constant 0 : i32
    return %arg0, %arg1, %c0_i32, %c0_i32_0 : i32, i32, i32, i32
  }
}

</mosaic_0001>

<llo_original>
// kernel: tpu_custom_call.1
$region0: #{tpu_custom_call.1}
  #allocation0 [shape = 'u32[]', space=smem, size = 0x4, offset = 0x4, fixed_abs, tag = 'smem constant byte address 0x4 - core index']
  #allocation1 [shape = 'u32[144,128]{1,0:T(1,128)}', space=vmem, size = 0x12000, scoped, tag = 'internal scratch']
  %s0 = inlined_call_operand.hbm [shape: f32[2,2,10,4,18], index: 0, kind: input, shape index: {}]
  %s1 = inlined_call_operand.vmem [shape: f32[9,4,1], index: 1, kind: input, shape index: {}]
  %s2 = inlined_call_operand.vmem [shape: bf16[8,4], index: 2, kind: input, shape index: {}]
  %s3 = inlined_call_operand.hbm [shape: f32[2,16,8,16], index: 3, kind: output, shape index: {}]
  %s4 = sld [smem:[#allocation0]]
  $region49: #{tpu_custom_call.1} parent=0
    _
  %s6 = ssub.s32 1, %s4
  %s7 = scalar_select 0, %s6, %s4
  $region1: #{tpu_custom_call.1} parent=0
    #allocation2 [shape = 'u8[40960]{0}', space=vmem, size = 0xa000, scoped, tag = 'input window, operand 0']
    #allocation3 [shape = 's32[2]{0}', space=sflag, size = 0x8, scoped, tag = 'scoped memory for tpu_custom_call.1']
    #allocation4 [shape = 's32[2]{0}', space=sflag, size = 0x8, scoped, tag = 'scoped memory for tpu_custom_call.1']
    #allocation5 [shape = 'u8[65536]{0}', space=vmem, size = 0x10000, scoped, tag = 'output window, operand 0']
    %8 = vsyncpa [#allocation3], 0
    %s9 = scalar_lea.sflag [#allocation3], 1
    %10 = vsyncpa %s9, 0
    %11 = vsyncpa [#allocation4], 0
    %s12 = scalar_lea.sflag [#allocation4], 1
    %13 = vsyncpa %s12, 0
    loop: start=0, step=1, limit=6
    $region2: #{tpu_custom_call.1} parent=1 // loop_pre_header
      _
    $region3: #{tpu_custom_call.1} parent=1 // loop_header
      %s15 = sphi 0, %s19
      %p16 = scmp.ge.s32.totalorder %s15, 6
      %s22 = sphi 0, %s34
      %s23 = sphi 0, %s30
      %s24 = sphi 0, %s22
      %s25 = sphi 0, %s23
      %s26 = sphi 0, %s24
      %s27 = sphi 0, %s25
      %s39 = sphi 0, %s41
      %s42 = sphi 0, %s39
      %s43 = sphi 0, %s42
      %s59 = sphi 0, %s43
      %s63 = sphi 0, %s63
      %s65 = sphi 0, %s63
      %s66 = sphi 0, %s65
      %s80 = sphi 0, %s66
      %s84 = sphi 0, %s84
      %s86 = sphi 0, %s84
      %s87 = sphi 0, %s86
      %s101 = sphi 0, %s87
      %s109 = sphi 0, %s111
      %s112 = sphi 0, %s109
      %s113 = sphi 0, %s112
      %s129 = sphi 0, %s113
    $region4: #{tpu_custom_call.1} parent=1 // loop_header_branch
      %18 = sbr.rel (%p16) target = $region8
    $region5: #{tpu_custom_call.1} parent=1 // loop_body
      %s20 = ssub.s32 %s15, 1
      %s21 = ssub.s32 %s15, 2
      %s28 = sadd.s32 1, %s23
      %p29 = scmp.ge.s32.totalorder %s28, 2
      %s30 = scalar_select %p29, 0, %s28
      %s31 = sadd.s32 1, %s22
      %s32 = scalar_select %p29, %s31, %s22
      %p33 = scmp.ge.s32.totalorder %s32, 2
      %s34 = scalar_select %p33, 0, %s32
      %s35 = ssub.s32 %s22, %s34
      %s36 = ssub.s32 %s23, %s30
      %s37 = sor.u32 %s35, %s36
      %p38 = scmp.eq.s32.totalorder %s37, 0
      %s40 = sadd.s32 %s39, 1
      %s41 = scalar_select %p38, %s39, %s40
      %p44 = pneg %p38
      %p45 = scmp.eq.s32.totalorder %s15, 3
      %p46 = por %p44, %p45
      %p47 = scmp.ne.s32.totalorder %s39, %s42
      %p48 = scmp.eq.s32.totalorder %s15, 0
      %p49 = por %p47, %p48
      %p50 = scmp.ne.s32.totalorder %s39, %s42
      %p51 = scmp.eq.s32.totalorder %s20, 3
      %p52 = por %p50, %p51
      %p53 = scmp.ne.s32.totalorder %s42, %s43
      %p54 = scmp.eq.s32.totalorder %s20, 0
      %p55 = por %p53, %p54
      %p56 = scmp.ne.s32.totalorder %s42, %s43
      %p57 = scmp.eq.s32.totalorder %s21, 3
      %p58 = por %p56, %p57
      %p60 = scmp.ne.s32.totalorder %s43, %s59
      %p61 = scmp.eq.s32.totalorder %s21, 0
      %p62 = por %p60, %p61
      %s64 = sadd.s32 %s63, 1
      %p67 = scmp.eq.s32.totalorder %s15, 3
      %p68 = scmp.ne.s32.totalorder %s63, %s65
      %p69 = scmp.eq.s32.totalorder %s15, 0
      %p70 = por %p68, %p69
      %p71 = scmp.ne.s32.totalorder %s63, %s65
      %p72 = scmp.eq.s32.totalorder %s20, 3
      %p73 = por %p71, %p72
      %p74 = scmp.ne.s32.totalorder %s65, %s66
      %p75 = scmp.eq.s32.totalorder %s20, 0
      %p76 = por %p74, %p75
      %p77 = scmp.ne.s32.totalorder %s65, %s66
      %p78 = scmp.eq.s32.totalorder %s21, 3
      %p79 = por %p77, %p78
      %p81 = scmp.ne.s32.totalorder %s66, %s80
      %p82 = scmp.eq.s32.totalorder %s21, 0
      %p83 = por %p81, %p82
      %s85 = sadd.s32 %s84, 1
      %p88 = scmp.eq.s32.totalorder %s15, 3
      %p89 = scmp.ne.s32.totalorder %s84, %s86
      %p90 = scmp.eq.s32.totalorder %s15, 0
      %p91 = por %p89, %p90
      %p92 = scmp.ne.s32.totalorder %s84, %s86
      %p93 = scmp.eq.s32.totalorder %s20, 3
      %p94 = por %p92, %p93
      %p95 = scmp.ne.s32.totalorder %s86, %s87
      %p96 = scmp.eq.s32.totalorder %s20, 0
      %p97 = por %p95, %p96
      %p98 = scmp.ne.s32.totalorder %s86, %s87
      %p99 = scmp.eq.s32.totalorder %s21, 3
      %p100 = por %p98, %p99
      %p102 = scmp.ne.s32.totalorder %s87, %s101
      %p103 = scmp.eq.s32.totalorder %s21, 0
      %p104 = por %p102, %p103
      %s105 = ssub.s32 %s22, %s34
      %s106 = ssub.s32 %s23, %s30
      %s107 = sor.u32 %s105, %s106
      %p108 = scmp.eq.s32.totalorder %s107, 0
      %s110 = sadd.s32 %s109, 1
      %s111 = scalar_select %p108, %s109, %s110
      %p114 = pneg %p108
      %p115 = scmp.eq.s32.totalorder %s15, 3
      %p116 = por %p114, %p115
      %p117 = scmp.ne.s32.totalorder %s109, %s112
      %p118 = scmp.eq.s32.totalorder %s15, 0
      %p119 = por %p117, %p118
      %p120 = scmp.ne.s32.totalorder %s109, %s112
      %p121 = scmp.eq.s32.totalorder %s20, 3
      %p122 = por %p120, %p121
      %p123 = scmp.ne.s32.totalorder %s112, %s113
      %p124 = scmp.eq.s32.totalorder %s20, 0
      %p125 = por %p123, %p124
      %p126 = scmp.ne.s32.totalorder %s112, %s113
      %p127 = scmp.eq.s32.totalorder %s21, 3
      %p128 = por %p126, %p127
      %p130 = scmp.ne.s32.totalorder %s113, %s129
      %p131 = scmp.eq.s32.totalorder %s21, 0
      %p132 = por %p130, %p131
      %p133 = scmp.le.s32.totalorder 1, %s15
      %p134 = scmp.lt.s32.totalorder %s15, 5
      %p135 = pnand %p133, %p134
      %p136 = pneg %p135
      // Predicated region
      $region9: #{tpu_custom_call.1} parent=5 // pred_check
        _
      $region10: #{tpu_custom_call.1} parent=5 // pred_check_branch
        %138 = sbr.rel (%p135) target = $region12
      $region11: #{tpu_custom_call.1} parent=5 // pred_region
        %s139 = ssub.s32 %s15, 1
        // Predicated region
        $region13: #{tpu_custom_call.1} parent=11 // pred_check
          %p140 = pneg %p76
        $region14: #{tpu_custom_call.1} parent=11 // pred_check_branch
          %142 = sbr.rel (%p140) target = $region16
        $region15: #{tpu_custom_call.1} parent=11 // pred_region
          _
        $region16: #{tpu_custom_call.1} parent=11 // pred_fallthru
          _
        // Predicated region
        $region17: #{tpu_custom_call.1} parent=11 // pred_check
          %p143 = pneg %p97
        $region18: #{tpu_custom_call.1} parent=11 // pred_check_branch
          %145 = sbr.rel (%p143) target = $region20
        $region19: #{tpu_custom_call.1} parent=11 // pred_region
          _
        $region20: #{tpu_custom_call.1} parent=11 // pred_fallthru
          _
      $region12: #{tpu_custom_call.1} parent=5 // pred_fallthru
        _
      %p146 = scmp.lt.s32.totalorder %s15, 4
      // Predicated region
      $region21: #{tpu_custom_call.1} parent=5 // pred_check
        %p147 = pneg %p146
      $region22: #{tpu_custom_call.1} parent=5 // pred_check_branch
        %149 = sbr.rel (%p147) target = $region24
      $region23: #{tpu_custom_call.1} parent=5 // pred_region
        // Predicated region
        $region25: #{tpu_custom_call.1} parent=23 // pred_check
          %p150 = pneg %p49
        $region26: #{tpu_custom_call.1} parent=23 // pred_check_branch
          %152 = sbr.rel (%p150) target = $region28
        $region27: #{tpu_custom_call.1} parent=23 // pred_region
          %s153 = sand.u32 %s39, 1
          %s154 = scalar_lea.sflag [#allocation3], %s153
          %s155 = sand.u32 %s39, 1
          %s156 = smul.addr %s155, 40
          %s157 = scalar_lea.vmem [#allocation2], %s156
          %s159 = ssub.s32 640, 640
          %160 = vsyncadd %s154, %s159
          %s161 = smul.addr %s23, 10
          %s162 = smul.addr %s22, 20
          %s163 = sadd.s32 %s161, %s162
          %s164 = smul.addr %s163, 64
          %s165 = scalar_lea.hbm %s0, %s164
          %s166 = sshll.u32 %s157, 4
          %s167 = int_to_ptr.vmem [resolvable:$true] %s166
          %172 = dma.hbm_to_vmem [thread:$0]  %s165, 640, %s167, %s154, 64, 64, 4
        $region28: #{tpu_custom_call.1} parent=23 // pred_fallthru
          _
      $region24: #{tpu_custom_call.1} parent=5 // pred_fallthru
        _
      %p173 = scmp.le.s32.totalorder 1, %s15
      %p174 = scmp.lt.s32.totalorder %s15, 5
      %p175 = pnand %p173, %p174
      %p176 = pneg %p175
      // Predicated region
      $region29: #{tpu_custom_call.1} parent=5 // pred_check
        _
      $region30: #{tpu_custom_call.1} parent=5 // pred_check_branch
        %178 = sbr.rel (%p175) target = $region32
      $region31: #{tpu_custom_call.1} parent=5 // pred_region
        %s179 = ssub.s32 %s15, 1
        %s180 = sand.u32 %s42, 1
        %s181 = scalar_lea.sflag [#allocation3], %s180
        %s182 = sand.u32 %s42, 1
        %s183 = smul.addr %s182, 40
        %s184 = scalar_lea.vmem [#allocation2], %s183
        // Predicated region
        $region33: #{tpu_custom_call.1} parent=31 // pred_check
          %p185 = pneg %p55
        $region34: #{tpu_custom_call.1} parent=31 // pred_check_branch
          %187 = sbr.rel (%p185) target = $region36
        $region35: #{tpu_custom_call.1} parent=31 // pred_region
          %188 = dma.done %s181, 640
        $region36: #{tpu_custom_call.1} parent=31 // pred_fallthru
          _
        %s189 = sand.u32 %s42, 1
        %s190 = scalar_lea.sflag [#allocation3], %s189
        %s191 = sand.u32 %s42, 1
        %s192 = smul.addr %s191, 40
        %s193 = scalar_lea.vmem [#allocation2], %s192
        %p194 = pneg %p55
        %p195 = pneg %p52
        %p196 = pneg %p76
        %p197 = pneg %p73
        %p198 = pneg %p97
        %p199 = pneg %p94
        %p200 = pneg %p125
        %p201 = pneg %p122
        %s202 = sand.u32 %s112, 1
        %s203 = scalar_lea.sflag [#allocation4], %s202
        %s204 = sand.u32 %s112, 1
        %s205 = smul.addr %s204, 64
        %s206 = scalar_lea.vmem [#allocation5], %s205
        %s207 = smul.u32 8, %s25
        %v209 = vld [vmem:[%s184] sm:$0xf]
        %v210 = vld [vmem:[%s184 + $0x4] sm:$0xf]
        %v211 = vld [vmem:[%s184 + $0x8] sm:$0xf]
        %v212 = vld [vmem:[%s184 + $0xc] sm:$0xf]
        %v213 = vld [vmem:[%s184 + $0x10] sm:$0xf]
        %v214 = vld [vmem:[%s184 + $0x14] sm:$0xf]
        %v215 = vld [vmem:[%s184 + $0x18] sm:$0xf]
        %v216 = vld [vmem:[%s184 + $0x1c] sm:$0xf]
        %v217 = vld [vmem:[%s184 + $0x20] sm:$0xf]
        %v218 = vld [vmem:[%s184 + $0x24] sm:$0xf]
        %v219 = vld [vmem:[%s1] sm:$0xf]
        %221 = vset.pattern.permute.xlu0 0
        %222 = vperm.xlu0 %221, %v219
        %v223 = vpop.permute.xlu0 %222
        %v225 = vmul.f32 %v209, %v223
        %v226 = vmul.f32 %v210, %v223
        %v227 = vmul.f32 %v211, %v223
        %v228 = vmul.f32 %v212, %v223
        %v229 = vmul.f32 %v213, %v223
        %v230 = vmul.f32 %v214, %v223
        %v231 = vmul.f32 %v215, %v223
        %v232 = vmul.f32 %v216, %v223
        %v233 = vadd.f32 %v225, 0.0
        %v234 = vadd.f32 %v226, 0.0
        %v235 = vadd.f32 %v227, 0.0
        %v236 = vadd.f32 %v228, 0.0
        %v237 = vadd.f32 %v229, 0.0
        %v238 = vadd.f32 %v230, 0.0
        %v239 = vadd.f32 %v231, 0.0
        %v240 = vadd.f32 %v232, 0.0
        %s241 = scalar_lea.vmem %s1, 4
        %v242 = vld [vmem:[%s241] sm:$0xf]
        %244 = vset.pattern.permute.xlu0 0
        %245 = vperm.xlu0 %244, %v242
        %v246 = vpop.permute.xlu0 %245
        %v248 = vmul.f32 %v209, %v246
        %v249 = vmul.f32 %v210, %v246
        %v250 = vmul.f32 %v211, %v246
        %v251 = vmul.f32 %v212, %v246
        %v252 = vmul.f32 %v213, %v246
        %v253 = vmul.f32 %v214, %v246
        %v254 = vmul.f32 %v215, %v246
        %v255 = vmul.f32 %v216, %v246
        %264 = vrot.lane.b32.xlu0 %v248, 127
        %v265 = vpop.permute.xlu0 %264
        %266 = vrot.lane.b32.xlu0 %v249, 127
        %v267 = vpop.permute.xlu0 %266
        %268 = vrot.lane.b32.xlu0 %v250, 127
        %v269 = vpop.permute.xlu0 %268
        %270 = vrot.lane.b32.xlu0 %v251, 127
        %v271 = vpop.permute.xlu0 %270
        %272 = vrot.lane.b32.xlu0 %v252, 127
        %v273 = vpop.permute.xlu0 %272
        %274 = vrot.lane.b32.xlu0 %v253, 127
        %v275 = vpop.permute.xlu0 %274
        %276 = vrot.lane.b32.xlu0 %v254, 127
        %v277 = vpop.permute.xlu0 %276
        %278 = vrot.lane.b32.xlu0 %v255, 127
        %v279 = vpop.permute.xlu0 %278
        %v288 = vadd.f32 %v233, %v265
        %v289 = vadd.f32 %v234, %v267
        %v290 = vadd.f32 %v235, %v269
        %v291 = vadd.f32 %v236, %v271
        %v292 = vadd.f32 %v237, %v273
        %v293 = vadd.f32 %v238, %v275
        %v294 = vadd.f32 %v239, %v277
        %v295 = vadd.f32 %v240, %v279
        %s296 = scalar_lea.vmem %s1, 8
        %v297 = vld [vmem:[%s296] sm:$0xf]
        %299 = vset.pattern.permute.xlu0 0
        %300 = vperm.xlu0 %299, %v297
        %v301 = vpop.permute.xlu0 %300
        %v303 = vmul.f32 %v209, %v301
        %v304 = vmul.f32 %v210, %v301
        %v305 = vmul.f32 %v211, %v301
        %v306 = vmul.f32 %v212, %v301
        %v307 = vmul.f32 %v213, %v301
        %v308 = vmul.f32 %v214, %v301
        %v309 = vmul.f32 %v215, %v301
        %v310 = vmul.f32 %v216, %v301
        %319 = vrot.lane.b32.xlu0 %v303, 126
        %v320 = vpop.permute.xlu0 %319
        %321 = vrot.lane.b32.xlu0 %v304, 126
        %v322 = vpop.permute.xlu0 %321
        %323 = vrot.lane.b32.xlu0 %v305, 126
        %v324 = vpop.permute.xlu0 %323
        %325 = vrot.lane.b32.xlu0 %v306, 126
        %v326 = vpop.permute.xlu0 %325
        %327 = vrot.lane.b32.xlu0 %v307, 126
        %v328 = vpop.permute.xlu0 %327
        %329 = vrot.lane.b32.xlu0 %v308, 126
        %v330 = vpop.permute.xlu0 %329
        %331 = vrot.lane.b32.xlu0 %v309, 126
        %v332 = vpop.permute.xlu0 %331
        %333 = vrot.lane.b32.xlu0 %v310, 126
        %v334 = vpop.permute.xlu0 %333
        %v343 = vadd.f32 %v288, %v320
        %v344 = vadd.f32 %v289, %v322
        %v345 = vadd.f32 %v290, %v324
        %v346 = vadd.f32 %v291, %v326
        %v347 = vadd.f32 %v292, %v328
        %v348 = vadd.f32 %v293, %v330
        %v349 = vadd.f32 %v294, %v332
        %v350 = vadd.f32 %v295, %v334
        %s351 = scalar_lea.vmem %s1, 12
        %v352 = vld [vmem:[%s351] sm:$0xf]
        %354 = vset.pattern.permute.xlu0 0
        %355 = vperm.xlu0 %354, %v352
        %v356 = vpop.permute.xlu0 %355
        %v358 = vmul.f32 %v210, %v356
        %v359 = vmul.f32 %v211, %v356
        %v360 = vmul.f32 %v212, %v356
        %v361 = vmul.f32 %v213, %v356
        %v362 = vmul.f32 %v214, %v356
        %v363 = vmul.f32 %v215, %v356
        %v364 = vmul.f32 %v216, %v356
        %v365 = vmul.f32 %v217, %v356
        %v366 = vadd.f32 %v343, %v358
        %v367 = vadd.f32 %v344, %v359
        %v368 = vadd.f32 %v345, %v360
        %v369 = vadd.f32 %v346, %v361
        %v370 = vadd.f32 %v347, %v362
        %v371 = vadd.f32 %v348, %v363
        %v372 = vadd.f32 %v349, %v364
        %v373 = vadd.f32 %v350, %v365
        %s374 = scalar_lea.vmem %s1, 16
        %v375 = vld [vmem:[%s374] sm:$0xf]
        %377 = vset.pattern.permute.xlu0 0
        %378 = vperm.xlu0 %377, %v375
        %v379 = vpop.permute.xlu0 %378
        %v381 = vmul.f32 %v210, %v379
        %v382 = vmul.f32 %v211, %v379
        %v383 = vmul.f32 %v212, %v379
        %v384 = vmul.f32 %v213, %v379
        %v385 = vmul.f32 %v214, %v379
        %v386 = vmul.f32 %v215, %v379
        %v387 = vmul.f32 %v216, %v379
        %v388 = vmul.f32 %v217, %v379
        %397 = vrot.lane.b32.xlu0 %v381, 127
        %v398 = vpop.permute.xlu0 %397
        %399 = vrot.lane.b32.xlu0 %v382, 127
        %v400 = vpop.permute.xlu0 %399
        %401 = vrot.lane.b32.xlu0 %v383, 127
        %v402 = vpop.permute.xlu0 %401
        %403 = vrot.lane.b32.xlu0 %v384, 127
        %v404 = vpop.permute.xlu0 %403
        %405 = vrot.lane.b32.xlu0 %v385, 127
        %v406 = vpop.permute.xlu0 %405
        %407 = vrot.lane.b32.xlu0 %v386, 127
        %v408 = vpop.permute.xlu0 %407
        %409 = vrot.lane.b32.xlu0 %v387, 127
        %v410 = vpop.permute.xlu0 %409
        %411 = vrot.lane.b32.xlu0 %v388, 127
        %v412 = vpop.permute.xlu0 %411
        %v421 = vadd.f32 %v366, %v398
        %v422 = vadd.f32 %v367, %v400
        %v423 = vadd.f32 %v368, %v402
        %v424 = vadd.f32 %v369, %v404
        %v425 = vadd.f32 %v370, %v406
        %v426 = vadd.f32 %v371, %v408
        %v427 = vadd.f32 %v372, %v410
        %v428 = vadd.f32 %v373, %v412
        %s429 = scalar_lea.vmem %s1, 20
        %v430 = vld [vmem:[%s429] sm:$0xf]
        %432 = vset.pattern.permute.xlu0 0
        %433 = vperm.xlu0 %432, %v430
        %v434 = vpop.permute.xlu0 %433
        %v436 = vmul.f32 %v210, %v434
        %v437 = vmul.f32 %v211, %v434
        %v438 = vmul.f32 %v212, %v434
        %v439 = vmul.f32 %v213, %v434
        %v440 = vmul.f32 %v214, %v434
        %v441 = vmul.f32 %v215, %v434
        %v442 = vmul.f32 %v216, %v434
        %v443 = vmul.f32 %v217, %v434
        %452 = vrot.lane.b32.xlu0 %v436, 126
        %v453 = vpop.permute.xlu0 %452
        %454 = vrot.lane.b32.xlu0 %v437, 126
        %v455 = vpop.permute.xlu0 %454
        %456 = vrot.lane.b32.xlu0 %v438, 126
        %v457 = vpop.permute.xlu0 %456
        %458 = vrot.lane.b32.xlu0 %v439, 126
        %v459 = vpop.permute.xlu0 %458
        %460 = vrot.lane.b32.xlu0 %v440, 126
        %v461 = vpop.permute.xlu0 %460
        %462 = vrot.lane.b32.xlu0 %v441, 126
        %v463 = vpop.permute.xlu0 %462
        %464 = vrot.lane.b32.xlu0 %v442, 126
        %v465 = vpop.permute.xlu0 %464
        %466 = vrot.lane.b32.xlu0 %v443, 126
        %v467 = vpop.permute.xlu0 %466
        %v476 = vadd.f32 %v421, %v453
        %v477 = vadd.f32 %v422, %v455
        %v478 = vadd.f32 %v423, %v457
        %v479 = vadd.f32 %v424, %v459
        %v480 = vadd.f32 %v425, %v461
        %v481 = vadd.f32 %v426, %v463
        %v482 = vadd.f32 %v427, %v465
        %v483 = vadd.f32 %v428, %v467
        %s484 = scalar_lea.vmem %s1, 24
        %v485 = vld [vmem:[%s484] sm:$0xf]
        %487 = vset.pattern.permute.xlu0 0
        %488 = vperm.xlu0 %487, %v485
        %v489 = vpop.permute.xlu0 %488
        %v491 = vmul.f32 %v211, %v489
        %v492 = vmul.f32 %v212, %v489
        %v493 = vmul.f32 %v213, %v489
        %v494 = vmul.f32 %v214, %v489
        %v495 = vmul.f32 %v215, %v489
        %v496 = vmul.f32 %v216, %v489
        %v497 = vmul.f32 %v217, %v489
        %v498 = vmul.f32 %v218, %v489
        %v499 = vadd.f32 %v476, %v491
        %v500 = vadd.f32 %v477, %v492
        %v501 = vadd.f32 %v478, %v493
        %v502 = vadd.f32 %v479, %v494
        %v503 = vadd.f32 %v480, %v495
        %v504 = vadd.f32 %v481, %v496
        %v505 = vadd.f32 %v482, %v497
        %v506 = vadd.f32 %v483, %v498
        %s507 = scalar_lea.vmem %s1, 28
        %v508 = vld [vmem:[%s507] sm:$0xf]
        %510 = vset.pattern.permute.xlu0 0
        %511 = vperm.xlu0 %510, %v508
        %v512 = vpop.permute.xlu0 %511
        %v514 = vmul.f32 %v211, %v512
        %v515 = vmul.f32 %v212, %v512
        %v516 = vmul.f32 %v213, %v512
        %v517 = vmul.f32 %v214, %v512
        %v518 = vmul.f32 %v215, %v512
        %v519 = vmul.f32 %v216, %v512
        %v520 = vmul.f32 %v217, %v512
        %v521 = vmul.f32 %v218, %v512
        %530 = vrot.lane.b32.xlu0 %v514, 127
        %v531 = vpop.permute.xlu0 %530
        %532 = vrot.lane.b32.xlu0 %v515, 127
        %v533 = vpop.permute.xlu0 %532
        %534 = vrot.lane.b32.xlu0 %v516, 127
        %v535 = vpop.permute.xlu0 %534
        %536 = vrot.lane.b32.xlu0 %v517, 127
        %v537 = vpop.permute.xlu0 %536
        %538 = vrot.lane.b32.xlu0 %v518, 127
        %v539 = vpop.permute.xlu0 %538
        %540 = vrot.lane.b32.xlu0 %v519, 127
        %v541 = vpop.permute.xlu0 %540
        %542 = vrot.lane.b32.xlu0 %v520, 127
        %v543 = vpop.permute.xlu0 %542
        %544 = vrot.lane.b32.xlu0 %v521, 127
        %v545 = vpop.permute.xlu0 %544
        %v554 = vadd.f32 %v499, %v531
        %v555 = vadd.f32 %v500, %v533
        %v556 = vadd.f32 %v501, %v535
        %v557 = vadd.f32 %v502, %v537
        %v558 = vadd.f32 %v503, %v539
        %v559 = vadd.f32 %v504, %v541
        %v560 = vadd.f32 %v505, %v543
        %v561 = vadd.f32 %v506, %v545
        %s562 = scalar_lea.vmem %s1, 32
        %v563 = vld [vmem:[%s562] sm:$0xf]
        %565 = vset.pattern.permute.xlu0 0
        %566 = vperm.xlu0 %565, %v563
        %v567 = vpop.permute.xlu0 %566
        %v569 = vmul.f32 %v211, %v567
        %v570 = vmul.f32 %v212, %v567
        %v571 = vmul.f32 %v213, %v567
        %v572 = vmul.f32 %v214, %v567
        %v573 = vmul.f32 %v215, %v567
        %v574 = vmul.f32 %v216, %v567
        %v575 = vmul.f32 %v217, %v567
        %v576 = vmul.f32 %v218, %v567
        %585 = vrot.lane.b32.xlu0 %v569, 126
        %v586 = vpop.permute.xlu0 %585
        %587 = vrot.lane.b32.xlu0 %v570, 126
        %v588 = vpop.permute.xlu0 %587
        %589 = vrot.lane.b32.xlu0 %v571, 126
        %v590 = vpop.permute.xlu0 %589
        %591 = vrot.lane.b32.xlu0 %v572, 126
        %v592 = vpop.permute.xlu0 %591
        %593 = vrot.lane.b32.xlu0 %v573, 126
        %v594 = vpop.permute.xlu0 %593
        %595 = vrot.lane.b32.xlu0 %v574, 126
        %v596 = vpop.permute.xlu0 %595
        %597 = vrot.lane.b32.xlu0 %v575, 126
        %v598 = vpop.permute.xlu0 %597
        %599 = vrot.lane.b32.xlu0 %v576, 126
        %v600 = vpop.permute.xlu0 %599
        %v609 = vadd.f32 %v554, %v586
        %v610 = vadd.f32 %v555, %v588
        %v611 = vadd.f32 %v556, %v590
        %v612 = vadd.f32 %v557, %v592
        %v613 = vadd.f32 %v558, %v594
        %v614 = vadd.f32 %v559, %v596
        %v615 = vadd.f32 %v560, %v598
        %v616 = vadd.f32 %v561, %v600
        %v617 = vld [vmem:[%s2] sm:$0xf]
        %v618 = vpack.c.bf16 %v609, %v609
        %vm619 = vcmask 31744
        %v621 = vsel %vm619, %v617, 0
        %vm623 = vcmask 1041408
        %v625 = vsel %vm623, %v618, 0
        %627 = vmatprep.subr.bf16.mxu0 0
        %628 = vmatpush1.bf16.msra.mxu0 %v625
        %629 = vmatprep.subr.bf16.mxu0 0
        %630 = vmatpush1.bf16.msra.mxu0 0
        %631 = vmatprep.subr.bf16.mxu0 0
        %632 = vmatpush1.bf16.msra.mxu0 0
        %633 = vmatprep.subr.bf16.mxu0 0
        %634 = vmatpush1.bf16.msra.mxu0 0
        %635 = vmatprep.subr.bf16.mxu0 0
        %636 = vmatpush1.bf16.msra.mxu0 0
        %637 = vmatprep.subr.bf16.mxu0 0
        %638 = vmatpush1.bf16.msra.mxu0 0
        %639 = vmatprep.subr.bf16.mxu0 0
        %640 = vmatpush1.bf16.msra.mxu0 0
        %641 = vmatprep.subr.bf16.mxu0 0
        %642 = vmatpush1.bf16.msra.mxu0 0
        %643 = vmatprep.subr.bf16.mxu0 0
        %644 = vmatpush1.bf16.msra.mxu0 0
        %645 = vmatprep.subr.bf16.mxu0 0
        %646 = vmatpush1.bf16.msra.mxu0 0
        %647 = vmatprep.subr.bf16.mxu0 0
        %648 = vmatpush1.bf16.msra.mxu0 0
        %649 = vmatprep.subr.bf16.mxu0 0
        %650 = vmatpush1.bf16.msra.mxu0 0
        %651 = vmatprep.subr.bf16.mxu0 0
        %652 = vmatpush1.bf16.msra.mxu0 0
        %653 = vmatprep.subr.bf16.mxu0 0
        %654 = vmatpush1.bf16.msra.mxu0 0
        %655 = vmatprep.subr.bf16.mxu0 0
        %656 = vmatpush1.bf16.msra.mxu0 0
        %657 = vmatprep.subr.bf16.mxu0 0
        %658 = vmatpush1.bf16.msra.mxu0 0
        %659 = vmatprep.mubr.bf16.mxu0 0
        %660 = vmatmul.mubr.bf16.gmra.mrb[0].mxu0 %v621
        %v661 = vpop.f32.mrb[0].mxu0
        %v662 = vadd.f32 0.0, %v661
        %v663 = vpop.f32.mrb[0].mxu0
        %v664 = vpop.f32.mrb[0].mxu0
        %v665 = vpop.f32.mrb[0].mxu0
        %666 = vdwg.mxu0
        %v667 = vmax.f32 %v662, 0.0
        %vm668 = vcmask 130048
        %669 = vst.msk [vmem:[%s206] sm:$0xff] %vm668, %v667
        %v670 = vpack.c.bf16 %v610, %v610
        %v672 = vsel %vm623, %v670, 0
        %674 = vmatprep.subr.bf16.mxu0 0
        %675 = vmatpush1.bf16.msra.mxu0 %v672
        %676 = vmatprep.subr.bf16.mxu0 0
        %677 = vmatpush1.bf16.msra.mxu0 0
        %678 = vmatprep.subr.bf16.mxu0 0
        %679 = vmatpush1.bf16.msra.mxu0 0
        %680 = vmatprep.subr.bf16.mxu0 0
        %681 = vmatpush1.bf16.msra.mxu0 0
        %682 = vmatprep.subr.bf16.mxu0 0
        %683 = vmatpush1.bf16.msra.mxu0 0
        %684 = vmatprep.subr.bf16.mxu0 0
        %685 = vmatpush1.bf16.msra.mxu0 0
        %686 = vmatprep.subr.bf16.mxu0 0
        %687 = vmatpush1.bf16.msra.mxu0 0
        %688 = vmatprep.subr.bf16.mxu0 0
        %689 = vmatpush1.bf16.msra.mxu0 0
        %690 = vmatprep.subr.bf16.mxu0 0
        %691 = vmatpush1.bf16.msra.mxu0 0
        %692 = vmatprep.subr.bf16.mxu0 0
        %693 = vmatpush1.bf16.msra.mxu0 0
        %694 = vmatprep.subr.bf16.mxu0 0
        %695 = vmatpush1.bf16.msra.mxu0 0
        %696 = vmatprep.subr.bf16.mxu0 0
        %697 = vmatpush1.bf16.msra.mxu0 0
        %698 = vmatprep.subr.bf16.mxu0 0
        %699 = vmatpush1.bf16.msra.mxu0 0
        %700 = vmatprep.subr.bf16.mxu0 0
        %701 = vmatpush1.bf16.msra.mxu0 0
        %702 = vmatprep.subr.bf16.mxu0 0
        %703 = vmatpush1.bf16.msra.mxu0 0
        %704 = vmatprep.subr.bf16.mxu0 0
        %705 = vmatpush1.bf16.msra.mxu0 0
        %706 = vmatprep.mubr.bf16.mxu0 0
        %707 = vmatmul.mubr.bf16.gmra.mrb[0].mxu0 %v621
        %v708 = vpop.f32.mrb[0].mxu0
        %v709 = vadd.f32 0.0, %v708
        %v710 = vpop.f32.mrb[0].mxu0
        %v711 = vpop.f32.mrb[0].mxu0
        %v712 = vpop.f32.mrb[0].mxu0
        %713 = vdwg.mxu0
        %v714 = vmax.f32 %v709, 0.0
        %s715 = scalar_lea.vmem %s206, 8 [#allocation5]
        %716 = vst.msk [vmem:[%s715] sm:$0xff] %vm668, %v714
        %v717 = vpack.c.bf16 %v611, %v611
        %v719 = vsel %vm623, %v717, 0
        %721 = vmatprep.subr.bf16.mxu0 0
        %722 = vmatpush1.bf16.msra.mxu0 %v719
        %723 = vmatprep.subr.bf16.mxu0 0
        %724 = vmatpush1.bf16.msra.mxu0 0
        %725 = vmatprep.subr.bf16.mxu0 0
        %726 = vmatpush1.bf16.msra.mxu0 0
        %727 = vmatprep.subr.bf16.mxu0 0
        %728 = vmatpush1.bf16.msra.mxu0 0
        %729 = vmatprep.subr.bf16.mxu0 0
        %730 = vmatpush1.bf16.msra.mxu0 0
        %731 = vmatprep.subr.bf16.mxu0 0
        %732 = vmatpush1.bf16.msra.mxu0 0
        %733 = vmatprep.subr.bf16.mxu0 0
        %734 = vmatpush1.bf16.msra.mxu0 0
        %735 = vmatprep.subr.bf16.mxu0 0
        %736 = vmatpush1.bf16.msra.mxu0 0
        %737 = vmatprep.subr.bf16.mxu0 0
        %738 = vmatpush1.bf16.msra.mxu0 0
        %739 = vmatprep.subr.bf16.mxu0 0
        %740 = vmatpush1.bf16.msra.mxu0 0
        %741 = vmatprep.subr.bf16.mxu0 0
        %742 = vmatpush1.bf16.msra.mxu0 0
        %743 = vmatprep.subr.bf16.mxu0 0
        %744 = vmatpush1.bf16.msra.mxu0 0
        %745 = vmatprep.subr.bf16.mxu0 0
        %746 = vmatpush1.bf16.msra.mxu0 0
        %747 = vmatprep.subr.bf16.mxu0 0
        %748 = vmatpush1.bf16.msra.mxu0 0
        %749 = vmatprep.subr.bf16.mxu0 0
        %750 = vmatpush1.bf16.msra.mxu0 0
        %751 = vmatprep.subr.bf16.mxu0 0
        %752 = vmatpush1.bf16.msra.mxu0 0
        %753 = vmatprep.mubr.bf16.mxu0 0
        %754 = vmatmul.mubr.bf16.gmra.mrb[0].mxu0 %v621
        %v755 = vpop.f32.mrb[0].mxu0
        %v756 = vadd.f32 0.0, %v755
        %v757 = vpop.f32.mrb[0].mxu0
        %v758 = vpop.f32.mrb[0].mxu0
        %v759 = vpop.f32.mrb[0].mxu0
        %760 = vdwg.mxu0
        %v761 = vmax.f32 %v756, 0.0
        %s762 = scalar_lea.vmem %s206, 16 [#allocation5]
        %763 = vst.msk [vmem:[%s762] sm:$0xff] %vm668, %v761
        %v764 = vpack.c.bf16 %v612, %v612
        %v766 = vsel %vm623, %v764, 0
        %768 = vmatprep.subr.bf16.mxu0 0
        %769 = vmatpush1.bf16.msra.mxu0 %v766
        %770 = vmatprep.subr.bf16.mxu0 0
        %771 = vmatpush1.bf16.msra.mxu0 0
        %772 = vmatprep.subr.bf16.mxu0 0
        %773 = vmatpush1.bf16.msra.mxu0 0
        %774 = vmatprep.subr.bf16.mxu0 0
        %775 = vmatpush1.bf16.msra.mxu0 0
        %776 = vmatprep.subr.bf16.mxu0 0
        %777 = vmatpush1.bf16.msra.mxu0 0
        %778 = vmatprep.subr.bf16.mxu0 0
        %779 = vmatpush1.bf16.msra.mxu0 0
        %780 = vmatprep.subr.bf16.mxu0 0
        %781 = vmatpush1.bf16.msra.mxu0 0
        %782 = vmatprep.subr.bf16.mxu0 0
        %783 = vmatpush1.bf16.msra.mxu0 0
        %784 = vmatprep.subr.bf16.mxu0 0
        %785 = vmatpush1.bf16.msra.mxu0 0
        %786 = vmatprep.subr.bf16.mxu0 0
        %787 = vmatpush1.bf16.msra.mxu0 0
        %788 = vmatprep.subr.bf16.mxu0 0
        %789 = vmatpush1.bf16.msra.mxu0 0
        %790 = vmatprep.subr.bf16.mxu0 0
        %791 = vmatpush1.bf16.msra.mxu0 0
        %792 = vmatprep.subr.bf16.mxu0 0
        %793 = vmatpush1.bf16.msra.mxu0 0
        %794 = vmatprep.subr.bf16.mxu0 0
        %795 = vmatpush1.bf16.msra.mxu0 0
        %796 = vmatprep.subr.bf16.mxu0 0
        %797 = vmatpush1.bf16.msra.mxu0 0
        %798 = vmatprep.subr.bf16.mxu0 0
        %799 = vmatpush1.bf16.msra.mxu0 0
        %800 = vmatprep.mubr.bf16.mxu0 0
        %801 = vmatmul.mubr.bf16.gmra.mrb[0].mxu0 %v621
        %v802 = vpop.f32.mrb[0].mxu0
        %v803 = vadd.f32 0.0, %v802
        %v804 = vpop.f32.mrb[0].mxu0
        %v805 = vpop.f32.mrb[0].mxu0
        %v806 = vpop.f32.mrb[0].mxu0
        %807 = vdwg.mxu0
        %v808 = vmax.f32 %v803, 0.0
        %s809 = scalar_lea.vmem %s206, 24 [#allocation5]
        %810 = vst.msk [vmem:[%s809] sm:$0xff] %vm668, %v808
        %v811 = vpack.c.bf16 %v613, %v613
        %v813 = vsel %vm623, %v811, 0
        %815 = vmatprep.subr.bf16.mxu0 0
        %816 = vmatpush1.bf16.msra.mxu0 %v813
        %817 = vmatprep.subr.bf16.mxu0 0
        %818 = vmatpush1.bf16.msra.mxu0 0
        %819 = vmatprep.subr.bf16.mxu0 0
        %820 = vmatpush1.bf16.msra.mxu0 0
        %821 = vmatprep.subr.bf16.mxu0 0
        %822 = vmatpush1.bf16.msra.mxu0 0
        %823 = vmatprep.subr.bf16.mxu0 0
        %824 = vmatpush1.bf16.msra.mxu0 0
        %825 = vmatprep.subr.bf16.mxu0 0
        %826 = vmatpush1.bf16.msra.mxu0 0
        %827 = vmatprep.subr.bf16.mxu0 0
        %828 = vmatpush1.bf16.msra.mxu0 0
        %829 = vmatprep.subr.bf16.mxu0 0
        %830 = vmatpush1.bf16.msra.mxu0 0
        %831 = vmatprep.subr.bf16.mxu0 0
        %832 = vmatpush1.bf16.msra.mxu0 0
        %833 = vmatprep.subr.bf16.mxu0 0
        %834 = vmatpush1.bf16.msra.mxu0 0
        %835 = vmatprep.subr.bf16.mxu0 0
        %836 = vmatpush1.bf16.msra.mxu0 0
        %837 = vmatprep.subr.bf16.mxu0 0
        %838 = vmatpush1.bf16.msra.mxu0 0
        %839 = vmatprep.subr.bf16.mxu0 0
        %840 = vmatpush1.bf16.msra.mxu0 0
        %841 = vmatprep.subr.bf16.mxu0 0
        %842 = vmatpush1.bf16.msra.mxu0 0
        %843 = vmatprep.subr.bf16.mxu0 0
        %844 = vmatpush1.bf16.msra.mxu0 0
        %845 = vmatprep.subr.bf16.mxu0 0
        %846 = vmatpush1.bf16.msra.mxu0 0
        %847 = vmatprep.mubr.bf16.mxu0 0
        %848 = vmatmul.mubr.bf16.gmra.mrb[0].mxu0 %v621
        %v849 = vpop.f32.mrb[0].mxu0
        %v850 = vadd.f32 0.0, %v849
        %v851 = vpop.f32.mrb[0].mxu0
        %v852 = vpop.f32.mrb[0].mxu0
        %v853 = vpop.f32.mrb[0].mxu0
        %854 = vdwg.mxu0
        %v855 = vmax.f32 %v850, 0.0
        %s856 = scalar_lea.vmem %s206, 32 [#allocation5]
        %857 = vst.msk [vmem:[%s856] sm:$0xff] %vm668, %v855
        %v858 = vpack.c.bf16 %v614, %v614
        %v860 = vsel %vm623, %v858, 0
        %862 = vmatprep.subr.bf16.mxu0 0
        %863 = vmatpush1.bf16.msra.mxu0 %v860
        %864 = vmatprep.subr.bf16.mxu0 0
        %865 = vmatpush1.bf16.msra.mxu0 0
        %866 = vmatprep.subr.bf16.mxu0 0
        %867 = vmatpush1.bf16.msra.mxu0 0
        %868 = vmatprep.subr.bf16.mxu0 0
        %869 = vmatpush1.bf16.msra.mxu0 0
        %870 = vmatprep.subr.bf16.mxu0 0
        %871 = vmatpush1.bf16.msra.mxu0 0
        %872 = vmatprep.subr.bf16.mxu0 0
        %873 = vmatpush1.bf16.msra.mxu0 0
        %874 = vmatprep.subr.bf16.mxu0 0
        %875 = vmatpush1.bf16.msra.mxu0 0
        %876 = vmatprep.subr.bf16.mxu0 0
        %877 = vmatpush1.bf16.msra.mxu0 0
        %878 = vmatprep.subr.bf16.mxu0 0
        %879 = vmatpush1.bf16.msra.mxu0 0
        %880 = vmatprep.subr.bf16.mxu0 0
        %881 = vmatpush1.bf16.msra.mxu0 0
        %882 = vmatprep.subr.bf16.mxu0 0
        %883 = vmatpush1.bf16.msra.mxu0 0
        %884 = vmatprep.subr.bf16.mxu0 0
        %885 = vmatpush1.bf16.msra.mxu0 0
        %886 = vmatprep.subr.bf16.mxu0 0
        %887 = vmatpush1.bf16.msra.mxu0 0
        %888 = vmatprep.subr.bf16.mxu0 0
        %889 = vmatpush1.bf16.msra.mxu0 0
        %890 = vmatprep.subr.bf16.mxu0 0
        %891 = vmatpush1.bf16.msra.mxu0 0
        %892 = vmatprep.subr.bf16.mxu0 0
        %893 = vmatpush1.bf16.msra.mxu0 0
        %894 = vmatprep.mubr.bf16.mxu0 0
        %895 = vmatmul.mubr.bf16.gmra.mrb[0].mxu0 %v621
        %v896 = vpop.f32.mrb[0].mxu0
        %v897 = vadd.f32 0.0, %v896
        %v898 = vpop.f32.mrb[0].mxu0
        %v899 = vpop.f32.mrb[0].mxu0
        %v900 = vpop.f32.mrb[0].mxu0
        %901 = vdwg.mxu0
        %v902 = vmax.f32 %v897, 0.0
        %s903 = scalar_lea.vmem %s206, 40 [#allocation5]
        %904 = vst.msk [vmem:[%s903] sm:$0xff] %vm668, %v902
        %v905 = vpack.c.bf16 %v615, %v615
        %v907 = vsel %vm623, %v905, 0
        %909 = vmatprep.subr.bf16.mxu0 0
        %910 = vmatpush1.bf16.msra.mxu0 %v907
        %911 = vmatprep.subr.bf16.mxu0 0
        %912 = vmatpush1.bf16.msra.mxu0 0
        %913 = vmatprep.subr.bf16.mxu0 0
        %914 = vmatpush1.bf16.msra.mxu0 0
        %915 = vmatprep.subr.bf16.mxu0 0
        %916 = vmatpush1.bf16.msra.mxu0 0
        %917 = vmatprep.subr.bf16.mxu0 0
        %918 = vmatpush1.bf16.msra.mxu0 0
        %919 = vmatprep.subr.bf16.mxu0 0
        %920 = vmatpush1.bf16.msra.mxu0 0
        %921 = vmatprep.subr.bf16.mxu0 0
        %922 = vmatpush1.bf16.msra.mxu0 0
        %923 = vmatprep.subr.bf16.mxu0 0
        %924 = vmatpush1.bf16.msra.mxu0 0
        %925 = vmatprep.subr.bf16.mxu0 0
        %926 = vmatpush1.bf16.msra.mxu0 0
        %927 = vmatprep.subr.bf16.mxu0 0
        %928 = vmatpush1.bf16.msra.mxu0 0
        %929 = vmatprep.subr.bf16.mxu0 0
        %930 = vmatpush1.bf16.msra.mxu0 0
        %931 = vmatprep.subr.bf16.mxu0 0
        %932 = vmatpush1.bf16.msra.mxu0 0
        %933 = vmatprep.subr.bf16.mxu0 0
        %934 = vmatpush1.bf16.msra.mxu0 0
        %935 = vmatprep.subr.bf16.mxu0 0
        %936 = vmatpush1.bf16.msra.mxu0 0
        %937 = vmatprep.subr.bf16.mxu0 0
        %938 = vmatpush1.bf16.msra.mxu0 0
        %939 = vmatprep.subr.bf16.mxu0 0
        %940 = vmatpush1.bf16.msra.mxu0 0
        %941 = vmatprep.mubr.bf16.mxu0 0
        %942 = vmatmul.mubr.bf16.gmra.mrb[0].mxu0 %v621
        %v943 = vpop.f32.mrb[0].mxu0
        %v944 = vadd.f32 0.0, %v943
        %v945 = vpop.f32.mrb[0].mxu0
        %v946 = vpop.f32.mrb[0].mxu0
        %v947 = vpop.f32.mrb[0].mxu0
        %948 = vdwg.mxu0
        %v949 = vmax.f32 %v944, 0.0
        %s950 = scalar_lea.vmem %s206, 48 [#allocation5]
        %951 = vst.msk [vmem:[%s950] sm:$0xff] %vm668, %v949
        %v952 = vpack.c.bf16 %v616, %v616
        %v954 = vsel %vm623, %v952, 0
        %956 = vmatprep.subr.bf16.mxu0 0
        %957 = vmatpush1.bf16.msra.mxu0 %v954
        %958 = vmatprep.subr.bf16.mxu0 0
        %959 = vmatpush1.bf16.msra.mxu0 0
        %960 = vmatprep.subr.bf16.mxu0 0
        %961 = vmatpush1.bf16.msra.mxu0 0
        %962 = vmatprep.subr.bf16.mxu0 0
        %963 = vmatpush1.bf16.msra.mxu0 0
        %964 = vmatprep.subr.bf16.mxu0 0
        %965 = vmatpush1.bf16.msra.mxu0 0
        %966 = vmatprep.subr.bf16.mxu0 0
        %967 = vmatpush1.bf16.msra.mxu0 0
        %968 = vmatprep.subr.bf16.mxu0 0
        %969 = vmatpush1.bf16.msra.mxu0 0
        %970 = vmatprep.subr.bf16.mxu0 0
        %971 = vmatpush1.bf16.msra.mxu0 0
        %972 = vmatprep.subr.bf16.mxu0 0
        %973 = vmatpush1.bf16.msra.mxu0 0
        %974 = vmatprep.subr.bf16.mxu0 0
        %975 = vmatpush1.bf16.msra.mxu0 0
        %976 = vmatprep.subr.bf16.mxu0 0
        %977 = vmatpush1.bf16.msra.mxu0 0
        %978 = vmatprep.subr.bf16.mxu0 0
        %979 = vmatpush1.bf16.msra.mxu0 0
        %980 = vmatprep.subr.bf16.mxu0 0
        %981 = vmatpush1.bf16.msra.mxu0 0
        %982 = vmatprep.subr.bf16.mxu0 0
        %983 = vmatpush1.bf16.msra.mxu0 0
        %984 = vmatprep.subr.bf16.mxu0 0
        %985 = vmatpush1.bf16.msra.mxu0 0
        %986 = vmatprep.subr.bf16.mxu0 0
        %987 = vmatpush1.bf16.msra.mxu0 0
        %988 = vmatprep.mubr.bf16.mxu0 0
        %989 = vmatmul.mubr.bf16.gmra.mrb[0].mxu0 %v621
        %v990 = vpop.f32.mrb[0].mxu0
        %v991 = vadd.f32 0.0, %v990
        %v992 = vpop.f32.mrb[0].mxu0
        %v993 = vpop.f32.mrb[0].mxu0
        %v994 = vpop.f32.mrb[0].mxu0
        %995 = vdwg.mxu0
        %v996 = vmax.f32 %v991, 0.0
        %s997 = scalar_lea.vmem %s206, 56 [#allocation5]
        %998 = vst.msk [vmem:[%s997] sm:$0xff] %vm668, %v996
        %s999 = sand.u32 %s112, 1
        %s1000 = scalar_lea.sflag [#allocation4], %s999
        %s1001 = sand.u32 %s112, 1
        %s1002 = smul.addr %s1001, 64
        %s1003 = scalar_lea.vmem [#allocation5], %s1002
        // Predicated region
        $region37: #{tpu_custom_call.1} parent=31 // pred_check
          %p1004 = pneg %p122
        $region38: #{tpu_custom_call.1} parent=31 // pred_check_branch
          %1006 = sbr.rel (%p1004) target = $region40
        $region39: #{tpu_custom_call.1} parent=31 // pred_region
          %s1007 = smul.u32 8, %s25
          %s1009 = ssub.s32 1024, 1024
          %1010 = vsyncadd %s1000, %s1009
          %s1011 = smul.addr %s24, 16
          %s1012 = sadd.s32 %s1007, %s1011
          %s1013 = smul.addr %s1012, 128
          %s1014 = scalar_lea.hbm %s3, %s1013
          %s1015 = sshll.u32 %s1003, 4
          %s1016 = int_to_ptr.vmem [resolvable:$true] %s1015
          %1021 = dma.vmem_to_hbm [thread:$0]  %s1016, 1024, %s1014, %s1000, 128, 128, 8
        $region40: #{tpu_custom_call.1} parent=31 // pred_fallthru
          _
      $region32: #{tpu_custom_call.1} parent=5 // pred_fallthru
        _
      %p1022 = scmp.le.s32.totalorder 2, %s15
      // Predicated region
      $region41: #{tpu_custom_call.1} parent=5 // pred_check
        %p1023 = pneg %p1022
      $region42: #{tpu_custom_call.1} parent=5 // pred_check_branch
        %1025 = sbr.rel (%p1023) target = $region44
      $region43: #{tpu_custom_call.1} parent=5 // pred_region
        %s1026 = ssub.s32 %s15, 2
        // Predicated region
        $region45: #{tpu_custom_call.1} parent=43 // pred_check
          %p1027 = pneg %p128
        $region46: #{tpu_custom_call.1} parent=43 // pred_check_branch
          %1029 = sbr.rel (%p1027) target = $region48
        $region47: #{tpu_custom_call.1} parent=43 // pred_region
          %s1030 = sand.u32 %s113, 1
          %s1031 = scalar_lea.sflag [#allocation4], %s1030
          %s1032 = sand.u32 %s113, 1
          %s1033 = smul.addr %s1032, 64
          %s1034 = scalar_lea.vmem [#allocation5], %s1033
          %1035 = dma.done %s1031, 1024
        $region48: #{tpu_custom_call.1} parent=43 // pred_fallthru
          _
      $region44: #{tpu_custom_call.1} parent=5 // pred_fallthru
        _
    $region6: #{tpu_custom_call.1} parent=1 // loop_footer
      %s19 = sadd.s32 1, %s15
    $region7: #{tpu_custom_call.1} parent=1 // loop_footer_branch
      %14 = sbr.rel target = $region3
    $region8: #{tpu_custom_call.1} parent=1 // loop_exit
      _
    %1036 = vsyncpa [#allocation3], 1
    %s1037 = scalar_lea.sflag [#allocation3], 1
    %1038 = vsyncpa %s1037, 1
    %1039 = vsyncpa [#allocation4], 1
    %s1040 = scalar_lea.sflag [#allocation4], 1
    %1041 = vsyncpa %s1040, 1

</llo_original>
